<compile_context>
chip_gen: v7x
topology: tpu7x:2x2x1
jax: 0.10.0
libtpu: 0.0.40
codegen_flags: <defaults>
</compile_context>

<pallas_src>
import functools

import jax
import jax.numpy as jnp
from jax.experimental import pallas as pl
from jax.experimental.pallas import tpu as pltpu


def _round_up(n, m):
    return ((n + m - 1) // m) * m


def _vmem_capacity_bytes():
    """Physical VMEM per TensorCore; conservative default if unqueryable."""
    try:
        info = pltpu.get_tpu_info()
        for name in ("vmem_capacity_bytes", "vmem_bytes", "vmem_size_bytes"):
            v = getattr(info, name, None)
            if isinstance(v, int) and v > 0:
                return v
    except Exception:
        pass
    return 64 * 1024 * 1024  # v7x per-TC VMEM (the tightest generation)


def _choose_tiles(B, S, D, Cp, x_itemsize, budget_bytes):
    """Pick (TB, TS, B_pad, S_pad, est_bytes) maximizing the x tile under the
    VMEM budget.

    Layout constraints honoured:
      * x block is (TB, TS, D): TS must be a multiple of 8 or equal S,
        D equals the full array dim (no constraint on the leading TB).
      * out block is (TB, Cp): TB must be a multiple of 8 or equal B_pad.
    Padding of x is avoided whenever a dividing tile exists.
    """
    row_align = 16 if x_itemsize == 2 else 8  # sublane packing for x dtype

    def bytes_needed(tb, ts):
        # (8,128)-tile padded VMEM footprints; x and out are double-buffered,
        # the folded weight/bias are single-buffered, acc is scratch.
        xb = 2 * tb * _round_up(ts, row_align) * _round_up(D, 128) * x_itemsize
        outb = 2 * _round_up(tb, 8) * Cp * 4
        accb = _round_up(tb, 8) * _round_up(D, 128) * 4
        wb = _round_up(D, 8) * Cp * 4 + 8 * Cp * 4
        return xb + outb + accb + wb

    # --- sequence tile: whole sequence if it fits with a minimal batch tile,
    # else the largest multiple-of-8 divisor of S, else pad S and stream 8 rows.
    ts_cands = [S] + [t for t in range((S // 8) * 8, 7, -8) if S % t == 0]
    TS, S_pad = None, S
    for ts in ts_cands:
        if bytes_needed(8, ts) <= budget_bytes:
            TS = ts
            break
    if TS is None:
        TS = min(8, S)
        S_pad = _round_up(S, TS)
        # TODO(synk): if even an (8, TS, D) block overflows the budget, the D /
        # weight dimension needs its own grid tiling (not needed here).

    # --- batch tile: grow in sublane steps until the budget (or B) is reached.
    tb_hi = min(2048, _round_up(B, 8))
    TB = 8
    while TB + 8 <= tb_hi and bytes_needed(TB + 8, TS) <= budget_bytes:
        TB += 8

    if TB >= B:
        TB, B_pad = B, B                      # one batch tile; block == full dim
    elif B % TB == 0:
        B_pad = B
    else:
        div = next((t for t in range(TB, 7, -8) if B % t == 0), None)
        if div is not None:
            TB, B_pad = div, B                # dividing tile: no x padding
        else:
            B_pad = _round_up(B, TB)

    return TB, TS, B_pad, S_pad, bytes_needed(TB, TS)


def base_model_kernel(x_ref, w_ref, b_ref, out_ref, acc_ref, *, inv_s):
    # x_ref:   (TB, TS, D)  streamed (bf16)
    # w_ref:   (D, Cp)      folded encoder@classifier weight (f32, resident)
    # b_ref:   (1, Cp)      folded bias (f32, resident)
    # out_ref: (TB, Cp)
    # acc_ref: (TB, D) f32  running sequence-sum (persists across the S grid)
    j = pl.program_id(1)

    @pl.when(j == 0)
    def _init():
        acc_ref[...] = jnp.zeros_like(acc_ref)

    # Partial sequence-sum, accumulated in f32 regardless of the x stream dtype.
    acc_ref[...] += jnp.sum(x_ref[...].astype(jnp.float32), axis=1)

    @pl.when(j == pl.num_programs(1) - 1)
    def _finalize():
        pooled = acc_ref[...] * inv_s                               # (TB, D)
        logits = (
            jnp.dot(pooled, w_ref[...], preferred_element_type=jnp.float32)
            + b_ref[...]
        )                                                           # (TB, Cp)
        out_ref[...] = logits.astype(out_ref.dtype)


def base_model_forward(x, w_enc, b_enc, w_cls, b_cls, *, x_dtype=jnp.bfloat16):
    B, S, D = x.shape
    C = w_cls.shape[1]

    # ---- lane-dense output + affine fold (exact for Linear->Linear) --------
    Cp = _round_up(C, 128)
    w_cls_p = jnp.pad(w_cls.astype(jnp.float32), ((0, 0), (0, Cp - C)))
    b_cls_p = jnp.pad(b_cls.astype(jnp.float32), ((0, 0), (0, Cp - C)))
    w_comb = w_enc.astype(jnp.float32) @ w_cls_p                    # (D, Cp)
    b_comb = b_enc.astype(jnp.float32) @ w_cls_p + b_cls_p          # (1, Cp)

    # ---- generation-aware tile sizing --------------------------------------
    x_itemsize = jnp.dtype(x_dtype).itemsize
    vmem_cap = _vmem_capacity_bytes()
    budget = int(vmem_cap * 0.45)
    TB, TS, B_pad, S_pad, need = _choose_tiles(B, S, D, Cp, x_itemsize, budget)

    # Stream x at reduced precision; ideally the caller supplies bf16 directly
    # so this cast (an HBM read+write) disappears.
    x_in = x if x.dtype == x_dtype else x.astype(x_dtype)
    if B_pad != B or S_pad != S:
        # Zero rows add nothing to the sequence-sum; padded batch rows are
        # sliced off below.  Pad the (half-width) bf16 copy, not the f32 input.
        x_in = jnp.pad(x_in, ((0, B_pad - B), (0, S_pad - S), (0, 0)))

    grid = (B_pad // TB, S_pad // TS)

    vmem_limit = int(min(vmem_cap * 0.75, max(2 * need, 32 * 1024 * 1024)))

    cost = pl.CostEstimate(
        flops=int(2 * B_pad * D * Cp + B_pad * S_pad * D),
        transcendentals=0,
        bytes_accessed=int(
            x_in.size * x_itemsize
            + (w_comb.size + b_comb.size) * 4
            + B_pad * Cp * 4
        ),
    )

    kernel = functools.partial(base_model_kernel, inv_s=1.0 / S)

    def _call(single_buffered_weights):
        wkw = (
            {"pipeline_mode": pl.Buffered(1)} if single_buffered_weights else {}
        )
        return pl.pallas_call(
            kernel,
            out_shape=jax.ShapeDtypeStruct((B_pad, Cp), jnp.float32),
            grid_spec=pltpu.PrefetchScalarGridSpec(
                num_scalar_prefetch=0,
                grid=grid,
                in_specs=[
                    pl.BlockSpec((TB, TS, D), lambda i, j: (i, j, 0)),
                    pl.BlockSpec((D, Cp), lambda i, j: (0, 0), **wkw),
                    pl.BlockSpec((1, Cp), lambda i, j: (0, 0), **wkw),
                ],
                out_specs=pl.BlockSpec((TB, Cp), lambda i, j: (i, 0)),
                scratch_shapes=[pltpu.VMEM((TB, D), jnp.float32)],
            ),
            compiler_params=pltpu.CompilerParams(
                # batch axis independent (TC sharding on v7x); sequence axis is
                # the accumulator/reduction axis.
                dimension_semantics=("parallel", "arbitrary"),
                vmem_limit_bytes=vmem_limit,
            ),
            cost_estimate=cost,
        )(x_in, w_comb, b_comb)

    try:
        # Constant weight/bias blocks never re-fetch; single-buffer them so
        # they don't reserve two VMEM copies each.
        out_padded = _call(True)
    except Exception:
        # Fallback for builds that reject buffer_count=1 (default 2-deep).
        out_padded = _call(False)

    # Strip batch / class padding.
    return out_padded[:B, :C]


def reference_forward(x, w_enc, b_enc, w_cls, b_cls):
    hidden = jnp.einsum("bsd,dh->bsh", x, w_enc) + b_enc   # encoder
    pooled = hidden.mean(axis=1)                           # mean(dim=1)
    return pooled @ w_cls + b_cls                          # classifier


if __name__ == "__main__":
    # Small shapes consistent with the forward: batch=2, seq=8,
    # input feat=32, encoder hidden=32, num_classes=8.
    B, S, D, H, C = 2, 8, 32, 32, 8

    key = jax.random.PRNGKey(0)
    k_x, k_we, k_be, k_wc, k_bc = jax.random.split(key, 5)

    x = jax.random.normal(k_x, (B, S, D), dtype=jnp.float32)
    w_enc = jax.random.normal(k_we, (D, H), dtype=jnp.float32) * 0.05
    b_enc = jax.random.normal(k_be, (1, H), dtype=jnp.float32) * 0.05
    w_cls = jax.random.normal(k_wc, (H, C), dtype=jnp.float32) * 0.05
    b_cls = jax.random.normal(k_bc, (1, C), dtype=jnp.float32) * 0.05

    logits = base_model_forward(x, w_enc, b_enc, w_cls, b_cls)
    logits = jax.block_until_ready(logits)
    assert logits.shape == (B, C)

    # Exact-math check (same bf16 cast of x as the kernel stream).
    ref_bf16_in = reference_forward(
        x.astype(jnp.bfloat16).astype(jnp.float32), w_enc, b_enc, w_cls, b_cls
    )
    assert jnp.allclose(logits, ref_bf16_in, atol=1e-4, rtol=1e-4), float(
        jnp.max(jnp.abs(logits - ref_bf16_in))
    )

    # End-to-end check vs. the f32 reference (tolerance reflects bf16 x stream).
    ref = reference_forward(x, w_enc, b_enc, w_cls, b_cls)
    assert jnp.allclose(logits, ref, atol=5e-3, rtol=5e-3), float(
        jnp.max(jnp.abs(logits - ref))
    )

    print("KERNEL_OK")
</pallas_src>

<mosaic_0001>
module attributes {stable_mosaic.version = 11 : i64} {
  func.func @base_model_kernel(%arg0: i32, %arg1: i32, %arg2: memref<2x8x32xbf16, #tpu.memory_space<vmem>>, %arg3: memref<32x128xf32, #tpu.memory_space<vmem>>, %arg4: memref<1x128xf32, #tpu.memory_space<vmem>>, %arg5: memref<2x128xf32, #tpu.memory_space<vmem>>, %arg6: memref<2x32xf32, #tpu.memory_space<vmem>>) attributes {dimension_semantics = [#tpu.dimension_semantics<parallel>, #tpu.dimension_semantics<arbitrary>], iteration_bounds = array<i64: 1, 1>, scalar_prefetch = 0 : i64, scratch_operands = 1 : i64, tpu.core_type = #tpu.core_type<tc>, window_params = [{transform_indices = @transform_0, window_bounds = array<i64: 2, 8, 32>}, {pipeline_mode = #tpu.pipeline_mode<synchronous>, transform_indices = @transform_1, window_bounds = array<i64: 32, 128>}, {pipeline_mode = #tpu.pipeline_mode<synchronous>, transform_indices = @transform_2, window_bounds = array<i64: 1, 128>}, {transform_indices = @transform_3, window_bounds = array<i64: 2, 128>}]} {
    %c0_i32 = arith.constant 0 : i32
    %0 = arith.cmpi eq, %arg1, %c0_i32 : i32
    %1 = arith.extui %0 : i1 to i32
    %c0_i32_0 = arith.constant 0 : i32
    %2 = arith.cmpi ne, %1, %c0_i32_0 : i32
    scf.if %2 {
      %cst_9 = arith.constant 0.000000e+00 : f32
      %12 = vector.broadcast %cst_9 : f32 to vector<2x32xf32>
      %c0_10 = arith.constant 0 : index
      %c0_11 = arith.constant 0 : index
      %13 = vector.load %arg6[%c0_10, %c0_11] : memref<2x32xf32, #tpu.memory_space<vmem>>, vector<2x32xf32>
      tpu.vector_store %arg6[%c0_10, %c0_11], %12 {strides = array<i32>} : memref<2x32xf32, #tpu.memory_space<vmem>>, vector<2x32xf32>,
    } else {
    }
    %c0 = arith.constant 0 : index
    %c0_1 = arith.constant 0 : index
    %3 = vector.load %arg6[%c0, %c0_1] : memref<2x32xf32, #tpu.memory_space<vmem>>, vector<2x32xf32>
    %c0_2 = arith.constant 0 : index
    %c0_3 = arith.constant 0 : index
    %c0_4 = arith.constant 0 : index
    %4 = vector.load %arg2[%c0_2, %c0_3, %c0_4] : memref<2x8x32xbf16, #tpu.memory_space<vmem>>, vector<2x8x32xbf16>
    %5 = arith.extf %4 : vector<2x8x32xbf16> to vector<2x8x32xf32>
    %cst = arith.constant dense<0.000000e+00> : vector<2x32xf32>
    %6 = vector.multi_reduction <add>, %5, %cst [1] : vector<2x8x32xf32> to vector<2x32xf32>
    %7 = arith.addf %3, %6 : vector<2x32xf32>
    %c0_5 = arith.constant 0 : index
    %c0_6 = arith.constant 0 : index
    %8 = vector.load %arg6[%c0_5, %c0_6] : memref<2x32xf32, #tpu.memory_space<vmem>>, vector<2x32xf32>
    tpu.vector_store %arg6[%c0_5, %c0_6], %7 {strides = array<i32>} : memref<2x32xf32, #tpu.memory_space<vmem>>, vector<2x32xf32>,
    %c0_i32_7 = arith.constant 0 : i32
    %9 = arith.cmpi eq, %arg1, %c0_i32_7 : i32
    %10 = arith.extui %9 : i1 to i32
    %c0_i32_8 = arith.constant 0 : i32
    %11 = arith.cmpi ne, %10, %c0_i32_8 : i32
    scf.if %11 {
      %c0_9 = arith.constant 0 : index
      %c0_10 = arith.constant 0 : index
      %12 = vector.load %arg6[%c0_9, %c0_10] : memref<2x32xf32, #tpu.memory_space<vmem>>, vector<2x32xf32>
      %cst_11 = arith.constant 1.250000e-01 : f32
      %13 = vector.broadcast %cst_11 : f32 to vector<2x32xf32>
      %14 = arith.mulf %12, %13 : vector<2x32xf32>
      %c0_12 = arith.constant 0 : index
      %c0_13 = arith.constant 0 : index
      %15 = vector.load %arg3[%c0_12, %c0_13] : memref<32x128xf32, #tpu.memory_space<vmem>>, vector<32x128xf32>
      %cst_14 = arith.constant dense<0.000000e+00> : vector<2x128xf32>
      %16 = tpu.matmul %14, %15, %cst_14 {dimension_numbers = #tpu.dot_dimension_numbers<[1], [0], [0], [1], [0, 0, 1, 1], [], []>} : vector<2x32xf32>, vector<32x128xf32>, vector<2x128xf32> -> vector<2x128xf32>
      %c0_15 = arith.constant 0 : index
      %c0_16 = arith.constant 0 : index
      %17 = vector.load %arg4[%c0_15, %c0_16] : memref<1x128xf32, #tpu.memory_space<vmem>>, vector<1x128xf32>
      %18 = vector.broadcast %17 : vector<1x128xf32> to vector<2x128xf32>
      %19 = arith.addf %16, %18 : vector<2x128xf32>
      %c0_17 = arith.constant 0 : index
      %c0_18 = arith.constant 0 : index
      %20 = vector.load %arg5[%c0_17, %c0_18] : memref<2x128xf32, #tpu.memory_space<vmem>>, vector<2x128xf32>
      tpu.vector_store %arg5[%c0_17, %c0_18], %19 {strides = array<i32>} : memref<2x128xf32, #tpu.memory_space<vmem>>, vector<2x128xf32>,
    } else {
    }
    return
  }
  func.func @transform_0(%arg0: i32, %arg1: i32) -> (i32, i32, i32) {
    %c0_i32 = arith.constant 0 : i32
    %c0_i32_0 = arith.constant 0 : i32
    return %arg0, %arg1, %c0_i32 : i32, i32, i32
  }
  func.func @transform_1(%arg0: i32, %arg1: i32) -> (i32, i32) {
    %c0_i32 = arith.constant 0 : i32
    %c0_i32_0 = arith.constant 0 : i32
    %c0_i32_1 = arith.constant 0 : i32
    return %c0_i32, %c0_i32_0 : i32, i32
  }
  func.func @transform_2(%arg0: i32, %arg1: i32) -> (i32, i32) {
    %c0_i32 = arith.constant 0 : i32
    %c0_i32_0 = arith.constant 0 : i32
    %c0_i32_1 = arith.constant 0 : i32
    return %c0_i32, %c0_i32_0 : i32, i32
  }
  func.func @transform_3(%arg0: i32, %arg1: i32) -> (i32, i32) {
    %c0_i32 = arith.constant 0 : i32
    %c0_i32_0 = arith.constant 0 : i32
    return %arg0, %c0_i32 : i32, i32
  }
}

module attributes {stable_mosaic.version = 11 : i64} {
  func.func @base_model_kernel(%arg0: i32, %arg1: i32, %arg2: memref<2x8x32xbf16, #tpu.memory_space<vmem>>, %arg3: memref<32x128xf32, #tpu.memory_space<vmem>>, %arg4: memref<1x128xf32, #tpu.memory_space<vmem>>, %arg5: memref<2x128xf32, #tpu.memory_space<vmem>>, %arg6: memref<2x32xf32, #tpu.memory_space<vmem>>) attributes {dimension_semantics = [#tpu.dimension_semantics<parallel>, #tpu.dimension_semantics<arbitrary>], iteration_bounds = array<i64: 1, 1>, scalar_prefetch = 0 : i64, scratch_operands = 1 : i64, tpu.core_type = #tpu.core_type<tc>, window_params = [{transform_indices = @transform_0, window_bounds = array<i64: 2, 8, 32>}, {pipeline_mode = #tpu.pipeline_mode<synchronous>, transform_indices = @transform_1, window_bounds = array<i64: 32, 128>}, {pipeline_mode = #tpu.pipeline_mode<synchronous>, transform_indices = @transform_2, window_bounds = array<i64: 1, 128>}, {transform_indices = @transform_3, window_bounds = array<i64: 2, 128>}]} {
    %c0_i32 = arith.constant 0 : i32
    %0 = arith.cmpi eq, %arg1, %c0_i32 : i32
    %1 = arith.extui %0 : i1 to i32
    %c0_i32_0 = arith.constant 0 : i32
    %2 = arith.cmpi ne, %1, %c0_i32_0 : i32
    scf.if %2 {
      %cst_9 = arith.constant 0.000000e+00 : f32
      %12 = vector.broadcast %cst_9 : f32 to vector<2x32xf32>
      %c0_10 = arith.constant 0 : index
      %c0_11 = arith.constant 0 : index
      %13 = vector.load %arg6[%c0_10, %c0_11] : memref<2x32xf32, #tpu.memory_space<vmem>>, vector<2x32xf32>
      tpu.vector_store %arg6[%c0_10, %c0_11], %12 {strides = array<i32>} : memref<2x32xf32, #tpu.memory_space<vmem>>, vector<2x32xf32>,
    } else {
    }
    %c0 = arith.constant 0 : index
    %c0_1 = arith.constant 0 : index
    %3 = vector.load %arg6[%c0, %c0_1] : memref<2x32xf32, #tpu.memory_space<vmem>>, vector<2x32xf32>
    %c0_2 = arith.constant 0 : index
    %c0_3 = arith.constant 0 : index
    %c0_4 = arith.constant 0 : index
    %4 = vector.load %arg2[%c0_2, %c0_3, %c0_4] : memref<2x8x32xbf16, #tpu.memory_space<vmem>>, vector<2x8x32xbf16>
    %5 = arith.extf %4 : vector<2x8x32xbf16> to vector<2x8x32xf32>
    %cst = arith.constant dense<0.000000e+00> : vector<2x32xf32>
    %6 = vector.multi_reduction <add>, %5, %cst [1] : vector<2x8x32xf32> to vector<2x32xf32>
    %7 = arith.addf %3, %6 : vector<2x32xf32>
    %c0_5 = arith.constant 0 : index
    %c0_6 = arith.constant 0 : index
    %8 = vector.load %arg6[%c0_5, %c0_6] : memref<2x32xf32, #tpu.memory_space<vmem>>, vector<2x32xf32>
    tpu.vector_store %arg6[%c0_5, %c0_6], %7 {strides = array<i32>} : memref<2x32xf32, #tpu.memory_space<vmem>>, vector<2x32xf32>,
    %c0_i32_7 = arith.constant 0 : i32
    %9 = arith.cmpi eq, %arg1, %c0_i32_7 : i32
    %10 = arith.extui %9 : i1 to i32
    %c0_i32_8 = arith.constant 0 : i32
    %11 = arith.cmpi ne, %10, %c0_i32_8 : i32
    scf.if %11 {
      %c0_9 = arith.constant 0 : index
      %c0_10 = arith.constant 0 : index
      %12 = vector.load %arg6[%c0_9, %c0_10] : memref<2x32xf32, #tpu.memory_space<vmem>>, vector<2x32xf32>
      %cst_11 = arith.constant 1.250000e-01 : f32
      %13 = vector.broadcast %cst_11 : f32 to vector<2x32xf32>
      %14 = arith.mulf %12, %13 : vector<2x32xf32>
      %c0_12 = arith.constant 0 : index
      %c0_13 = arith.constant 0 : index
      %15 = vector.load %arg3[%c0_12, %c0_13] : memref<32x128xf32, #tpu.memory_space<vmem>>, vector<32x128xf32>
      %cst_14 = arith.constant dense<0.000000e+00> : vector<2x128xf32>
      %16 = tpu.matmul %14, %15, %cst_14 {dimension_numbers = #tpu.dot_dimension_numbers<[1], [0], [0], [1], [0, 0, 1, 1], [], []>} : vector<2x32xf32>, vector<32x128xf32>, vector<2x128xf32> -> vector<2x128xf32>
      %c0_15 = arith.constant 0 : index
      %c0_16 = arith.constant 0 : index
      %17 = vector.load %arg4[%c0_15, %c0_16] : memref<1x128xf32, #tpu.memory_space<vmem>>, vector<1x128xf32>
      %18 = vector.broadcast %17 : vector<1x128xf32> to vector<2x128xf32>
      %19 = arith.addf %16, %18 : vector<2x128xf32>
      %c0_17 = arith.constant 0 : index
      %c0_18 = arith.constant 0 : index
      %20 = vector.load %arg5[%c0_17, %c0_18] : memref<2x128xf32, #tpu.memory_space<vmem>>, vector<2x128xf32>
      tpu.vector_store %arg5[%c0_17, %c0_18], %19 {strides = array<i32>} : memref<2x128xf32, #tpu.memory_space<vmem>>, vector<2x128xf32>,
    } else {
    }
    return
  }
  func.func @transform_0(%arg0: i32, %arg1: i32) -> (i32, i32, i32) {
    %c0_i32 = arith.constant 0 : i32
    %c0_i32_0 = arith.constant 0 : i32
    return %arg0, %arg1, %c0_i32 : i32, i32, i32
  }
  func.func @transform_1(%arg0: i32, %arg1: i32) -> (i32, i32) {
    %c0_i32 = arith.constant 0 : i32
    %c0_i32_0 = arith.constant 0 : i32
    %c0_i32_1 = arith.constant 0 : i32
    return %c0_i32, %c0_i32_0 : i32, i32
  }
  func.func @transform_2(%arg0: i32, %arg1: i32) -> (i32, i32) {
    %c0_i32 = arith.constant 0 : i32
    %c0_i32_0 = arith.constant 0 : i32
    %c0_i32_1 = arith.constant 0 : i32
    return %c0_i32, %c0_i32_0 : i32, i32
  }
  func.func @transform_3(%arg0: i32, %arg1: i32) -> (i32, i32) {
    %c0_i32 = arith.constant 0 : i32
    %c0_i32_0 = arith.constant 0 : i32
    return %arg0, %c0_i32 : i32, i32
  }
}

</mosaic_0001>

<llo_original>
// kernel: tpu_custom_call.1
$region0: #{tpu_custom_call.1}
  #allocation0 [shape = 'u32[]', space=smem, size = 0x4, offset = 0x4, fixed_abs, tag = 'smem constant byte address 0x4 - core index']
  #allocation1 [shape = 'u32[144,128]{1,0:T(1,128)}', space=vmem, size = 0x12000, scoped, tag = 'internal scratch']
  #allocation2 [shape = 'f32[2,32]{1,0:T(2,128)}', space=vmem, size = 0x400, scoped, tag = 'scratch operand']
  %s0 = inlined_call_operand.hbm [shape: bf16[2,8,32], index: 0, kind: input, shape index: {}]
  %s1 = inlined_call_operand.hbm [shape: f32[32,128], index: 1, kind: input, shape index: {}]
  %s2 = inlined_call_operand.vmem [shape: f32[1,128], index: 2, kind: input, shape index: {}]
  %s3 = inlined_call_operand.hbm [shape: f32[2,128], index: 3, kind: output, shape index: {}]
  %s4 = sld [smem:[#allocation0]]
  $region38: #{tpu_custom_call.1} parent=0
    _
  %s6 = ssub.s32 1, %s4
  %s7 = scalar_select 0, %s6, %s4
  $region1: #{tpu_custom_call.1} parent=0
    #allocation3 [shape = 'u8[4096]{0}', space=vmem, size = 0x1000, scoped, tag = 'input window, operand 0, single buffered']
    #allocation4 [shape = 's32[1]{0}', space=sflag, size = 0x4, scoped, tag = 'scoped memory for tpu_custom_call.1']
    #allocation5 [shape = 's32[1]{0}', space=sflag, size = 0x4, scoped, tag = 'scoped memory for tpu_custom_call.1']
    #allocation6 [shape = 'u8[16384]{0}', space=vmem, size = 0x4000, scoped, tag = 'input window, operand 1, single buffered']
    #allocation7 [shape = 's32[1]{0}', space=sflag, size = 0x4, scoped, tag = 'scoped memory for tpu_custom_call.1']
    #allocation8 [shape = 'u8[1024]{0}', space=vmem, size = 0x400, scoped, tag = 'output window, operand 0, single buffered']
    %8 = vsyncpa [#allocation4], 0
    %9 = vsyncpa [#allocation7], 0
    %10 = vsyncpa [#allocation5], 0
    // Predicated region
    $region2: #{tpu_custom_call.1} parent=1 // pred_check
      _
    $region3: #{tpu_custom_call.1} parent=1 // pred_check_branch
      %12 = sbr.rel (0) target = $region5
    $region4: #{tpu_custom_call.1} parent=1 // pred_region
      %s14 = ssub.s32 128, 128
      %15 = vsyncadd [#allocation4], %s14
      %s16 = sshll.u32 [#allocation3], 4
      %s17 = int_to_ptr.vmem [resolvable:$true] %s16
      %22 = dma.hbm_to_vmem [thread:$0]  %s0, 128, %s17, [#allocation4], 64, 64, 4
    $region5: #{tpu_custom_call.1} parent=1 // pred_fallthru
      _
    // Predicated region
    $region6: #{tpu_custom_call.1} parent=1 // pred_check
      _
    $region7: #{tpu_custom_call.1} parent=1 // pred_check_branch
      %24 = sbr.rel (0) target = $region9
    $region8: #{tpu_custom_call.1} parent=1 // pred_region
      %s26 = ssub.s32 512, 512
      %27 = vsyncadd [#allocation7], %s26
      %s28 = sshll.u32 [#allocation6], 4
      %s29 = int_to_ptr.vmem [resolvable:$true] %s28
      %34 = dma.hbm_to_vmem [thread:$0]  %s1, 512, %s29, [#allocation7], 128, 128, 8
    $region9: #{tpu_custom_call.1} parent=1 // pred_fallthru
      _
    // Predicated region
    $region10: #{tpu_custom_call.1} parent=1 // pred_check
      _
    $region11: #{tpu_custom_call.1} parent=1 // pred_check_branch
      %36 = sbr.rel (0) target = $region13
    $region12: #{tpu_custom_call.1} parent=1 // pred_region
      _
    $region13: #{tpu_custom_call.1} parent=1 // pred_fallthru
      _
    // Predicated region
    $region14: #{tpu_custom_call.1} parent=1 // pred_check
      _
    $region15: #{tpu_custom_call.1} parent=1 // pred_check_branch
      %38 = sbr.rel (0) target = $region17
    $region16: #{tpu_custom_call.1} parent=1 // pred_region
      %39 = dma.done [#allocation4], 128
    $region17: #{tpu_custom_call.1} parent=1 // pred_fallthru
      _
    // Predicated region
    $region18: #{tpu_custom_call.1} parent=1 // pred_check
      _
    $region19: #{tpu_custom_call.1} parent=1 // pred_check_branch
      %41 = sbr.rel (0) target = $region21
    $region20: #{tpu_custom_call.1} parent=1 // pred_region
      %42 = dma.done [#allocation7], 512
    $region21: #{tpu_custom_call.1} parent=1 // pred_fallthru
      _
    %p43 = scmp.eq.s32.totalorder 0, 0
    // Predicated region
    $region22: #{tpu_custom_call.1} parent=1 // pred_check
      %p44 = pneg %p43
    $region23: #{tpu_custom_call.1} parent=1 // pred_check_branch
      %46 = sbr.rel (%p44) target = $region25
    $region24: #{tpu_custom_call.1} parent=1 // pred_region
      %vm47 = vcmask 254976
      %48 = vst.msk [vmem:[#allocation2] sm:$0x3] %vm47, 0.0
    $region25: #{tpu_custom_call.1} parent=1 // pred_fallthru
      _
    %v49 = vld [vmem:[#allocation2] sm:$0x3]
    %v50 = vld [vmem:[#allocation3] sm:$0xf]
    %v51 = vld [vmem:[#allocation3 + $0x4] sm:$0xf]
    %v52 = vunpack.c.l.bf16 %v50
    %v53 = vunpack.c.l.bf16 %v51
    %vm54 = vcmask 261120
    %v55 = vsel %vm54, %v52, 0.0
    %v56 = vrot.slane %v55, 4
    %v57 = vadd.f32 %v55, %v56
    %v58 = vrot.slane %v57, 2
    %v59 = vadd.f32 %v57, %v58
    %v60 = vrot.slane %v59, 1
    %v61 = vadd.f32 %v59, %v60
    %v62 = vsel %vm54, %v53, 0.0
    %v63 = vrot.slane %v62, 4
    %v64 = vadd.f32 %v62, %v63
    %v65 = vrot.slane %v64, 2
    %v66 = vadd.f32 %v64, %v65
    %v67 = vrot.slane %v66, 1
    %v68 = vadd.f32 %v66, %v67
    %vm71 = vcmask 1041409
    %v72 = vsel %vm71, %v68, %v61
    %v74 = vadd.f32 %v49, %v72
    %vm75 = vcmask 254976
    %76 = vst.msk [vmem:[#allocation2] sm:$0x3] %vm75, %v74
    // Predicated region
    $region26: #{tpu_custom_call.1} parent=1 // pred_check
      %p77 = pneg %p43
    $region27: #{tpu_custom_call.1} parent=1 // pred_check_branch
      %79 = sbr.rel (%p77) target = $region29
    $region28: #{tpu_custom_call.1} parent=1 // pred_region
      %v80 = vld [vmem:[#allocation2] sm:$0x3]
      %v81 = vmul.f32 %v80, 0.125
      %v82 = vld [vmem:[#allocation6] sm:$0xff]
      %v83 = vld [vmem:[#allocation6 + $0x8] sm:$0xff]
      %v84 = vld [vmem:[#allocation6 + $0x10] sm:$0xff]
      %v85 = vld [vmem:[#allocation6 + $0x18] sm:$0xff]
      %v86 = vld [vmem:[%s2] sm:$0x1]
      %v88 = vlaneseq
      %v89 = vshrl.u32 %v88, 7
      %v90 = vsub.s32 0, %v89
      %v91 = vrot.slane %v86, %v90
      %v94 = vsel %vm54, %v81, 0
      %96 = vmatprep.subr.mxu0 0.0
      %97 = vmatpush1.msra.mxu0 %v82
      %98 = vmatprep.subr.mxu0 0.0
      %99 = vmatpush1.msra.mxu0 %v83
      %100 = vmatprep.subr.mxu0 0.0
      %101 = vmatpush1.msra.mxu0 %v84
      %102 = vmatprep.subr.mxu0 0.0
      %103 = vmatpush1.msra.mxu0 %v85
      %104 = vmatprep.subr.mxu0 0.0
      %105 = vmatpush1.msra.mxu0 0.0
      %106 = vmatprep.subr.mxu0 0.0
      %107 = vmatpush1.msra.mxu0 0.0
      %108 = vmatprep.subr.mxu0 0.0
      %109 = vmatpush1.msra.mxu0 0.0
      %110 = vmatprep.subr.mxu0 0.0
      %111 = vmatpush1.msra.mxu0 0.0
      %112 = vmatprep.subr.mxu0 0.0
      %113 = vmatpush1.msra.mxu0 0.0
      %114 = vmatprep.subr.mxu0 0.0
      %115 = vmatpush1.msra.mxu0 0.0
      %116 = vmatprep.subr.mxu0 0.0
      %117 = vmatpush1.msra.mxu0 0.0
      %118 = vmatprep.subr.mxu0 0.0
      %119 = vmatpush1.msra.mxu0 0.0
      %120 = vmatprep.subr.mxu0 0.0
      %121 = vmatpush1.msra.mxu0 0.0
      %122 = vmatprep.subr.mxu0 0.0
      %123 = vmatpush1.msra.mxu0 0.0
      %124 = vmatprep.subr.mxu0 0.0
      %125 = vmatpush1.msra.mxu0 0.0
      %126 = vmatprep.subr.mxu0 0.0
      %127 = vmatpush1.msra.mxu0 0.0
      %128 = vmatprep.subr.mxu0 0.0
      %129 = vmatpush1.msra.mxu0 0.0
      %130 = vmatprep.subr.mxu0 0.0
      %131 = vmatpush1.msra.mxu0 0.0
      %132 = vmatprep.subr.mxu0 0.0
      %133 = vmatpush1.msra.mxu0 0.0
      %134 = vmatprep.subr.mxu0 0.0
      %135 = vmatpush1.msra.mxu0 0.0
      %136 = vmatprep.subr.mxu0 0.0
      %137 = vmatpush1.msra.mxu0 0.0
      %138 = vmatprep.subr.mxu0 0.0
      %139 = vmatpush1.msra.mxu0 0.0
      %140 = vmatprep.subr.mxu0 0.0
      %141 = vmatpush1.msra.mxu0 0.0
      %142 = vmatprep.subr.mxu0 0.0
      %143 = vmatpush1.msra.mxu0 0.0
      %144 = vmatprep.subr.mxu0 0.0
      %145 = vmatpush1.msra.mxu0 0.0
      %146 = vmatprep.subr.mxu0 0.0
      %147 = vmatpush1.msra.mxu0 0.0
      %148 = vmatprep.subr.mxu0 0.0
      %149 = vmatpush1.msra.mxu0 0.0
      %150 = vmatprep.subr.mxu0 0.0
      %151 = vmatpush1.msra.mxu0 0.0
      %152 = vmatprep.subr.mxu0 0.0
      %153 = vmatpush1.msra.mxu0 0.0
      %154 = vmatprep.subr.mxu0 0.0
      %155 = vmatpush1.msra.mxu0 0.0
      %156 = vmatprep.subr.mxu0 0.0
      %157 = vmatpush1.msra.mxu0 0.0
      %158 = vmatprep.subr.mxu0 0.0
      %159 = vmatpush1.msra.mxu0 0.0
      %160 = vmatprep.mubr.f32.mxu0 0.0
      %161 = vmatmul.mubr.f32.gmra.mrb[0].mxu0 %v94
      %v162 = vpop.f32.mrb[0].mxu0
      %v163 = vadd.f32 %v91, %v162
      %v164 = vpop.f32.mrb[0].mxu0
      %165 = vdwg.mxu0
      %166 = vst [vmem:[#allocation8] sm:$0x3] %v163
    $region29: #{tpu_custom_call.1} parent=1 // pred_fallthru
      _
    // Predicated region
    $region30: #{tpu_custom_call.1} parent=1 // pred_check
      _
    $region31: #{tpu_custom_call.1} parent=1 // pred_check_branch
      %168 = sbr.rel (0) target = $region33
    $region32: #{tpu_custom_call.1} parent=1 // pred_region
      %s170 = ssub.s32 32, 32
      %171 = vsyncadd [#allocation5], %s170
      %s173 = sshll.u32 [#allocation8], 4
      %s174 = int_to_ptr.vmem [resolvable:$true] %s173
      %176 = dma.vmem_to_hbm [thread:$0]  %s174, 32, %s3, [#allocation5]
    $region33: #{tpu_custom_call.1} parent=1 // pred_fallthru
      _
    // Predicated region
    $region34: #{tpu_custom_call.1} parent=1 // pred_check
      _
    $region35: #{tpu_custom_call.1} parent=1 // pred_check_branch
      %178 = sbr.rel (0) target = $region37
    $region36: #{tpu_custom_call.1} parent=1 // pred_region
      %179 = dma.done [#allocation5], 32
    $region37: #{tpu_custom_call.1} parent=1 // pred_fallthru
      _
    %180 = vsyncpa [#allocation4], 1
    %181 = vsyncpa [#allocation7], 1
    %182 = vsyncpa [#allocation5], 1

// kernel: tpu_custom_call.1
$region0: #{tpu_custom_call.1}
  #allocation0 [shape = 'u32[]', space=smem, size = 0x4, offset = 0x4, fixed_abs, tag = 'smem constant byte address 0x4 - core index']
  #allocation1 [shape = 'u32[144,128]{1,0:T(1,128)}', space=vmem, size = 0x12000, scoped, tag = 'internal scratch']
  #allocation2 [shape = 'f32[2,32]{1,0:T(2,128)}', space=vmem, size = 0x400, scoped, tag = 'scratch operand']
  %s0 = inlined_call_operand.hbm [shape: bf16[2,8,32], index: 0, kind: input, shape index: {}]
  %s1 = inlined_call_operand.hbm [shape: f32[32,128], index: 1, kind: input, shape index: {}]
  %s2 = inlined_call_operand.vmem [shape: f32[1,128], index: 2, kind: input, shape index: {}]
  %s3 = inlined_call_operand.hbm [shape: f32[2,128], index: 3, kind: output, shape index: {}]
  %s4 = sld [smem:[#allocation0]]
  $region38: #{tpu_custom_call.1} parent=0
    _
  %s6 = ssub.s32 1, %s4
  %s7 = scalar_select 0, %s6, %s4
  $region1: #{tpu_custom_call.1} parent=0
    #allocation3 [shape = 'u8[4096]{0}', space=vmem, size = 0x1000, scoped, tag = 'input window, operand 0, single buffered']
    #allocation4 [shape = 's32[1]{0}', space=sflag, size = 0x4, scoped, tag = 'scoped memory for tpu_custom_call.1']
    #allocation5 [shape = 's32[1]{0}', space=sflag, size = 0x4, scoped, tag = 'scoped memory for tpu_custom_call.1']
    #allocation6 [shape = 'u8[16384]{0}', space=vmem, size = 0x4000, scoped, tag = 'input window, operand 1, single buffered']
    #allocation7 [shape = 's32[1]{0}', space=sflag, size = 0x4, scoped, tag = 'scoped memory for tpu_custom_call.1']
    #allocation8 [shape = 'u8[1024]{0}', space=vmem, size = 0x400, scoped, tag = 'output window, operand 0, single buffered']
    %8 = vsyncpa [#allocation4], 0
    %9 = vsyncpa [#allocation7], 0
    %10 = vsyncpa [#allocation5], 0
    // Predicated region
    $region2: #{tpu_custom_call.1} parent=1 // pred_check
      _
    $region3: #{tpu_custom_call.1} parent=1 // pred_check_branch
      %12 = sbr.rel (0) target = $region5
    $region4: #{tpu_custom_call.1} parent=1 // pred_region
      %s14 = ssub.s32 128, 128
      %15 = vsyncadd [#allocation4], %s14
      %s16 = sshll.u32 [#allocation3], 4
      %s17 = int_to_ptr.vmem [resolvable:$true] %s16
      %22 = dma.hbm_to_vmem [thread:$0]  %s0, 128, %s17, [#allocation4], 64, 64, 4
    $region5: #{tpu_custom_call.1} parent=1 // pred_fallthru
      _
    // Predicated region
    $region6: #{tpu_custom_call.1} parent=1 // pred_check
      _
    $region7: #{tpu_custom_call.1} parent=1 // pred_check_branch
      %24 = sbr.rel (0) target = $region9
    $region8: #{tpu_custom_call.1} parent=1 // pred_region
      %s26 = ssub.s32 512, 512
      %27 = vsyncadd [#allocation7], %s26
      %s28 = sshll.u32 [#allocation6], 4
      %s29 = int_to_ptr.vmem [resolvable:$true] %s28
      %34 = dma.hbm_to_vmem [thread:$0]  %s1, 512, %s29, [#allocation7], 128, 128, 8
    $region9: #{tpu_custom_call.1} parent=1 // pred_fallthru
      _
    // Predicated region
    $region10: #{tpu_custom_call.1} parent=1 // pred_check
      _
    $region11: #{tpu_custom_call.1} parent=1 // pred_check_branch
      %36 = sbr.rel (0) target = $region13
    $region12: #{tpu_custom_call.1} parent=1 // pred_region
      _
    $region13: #{tpu_custom_call.1} parent=1 // pred_fallthru
      _
    // Predicated region
    $region14: #{tpu_custom_call.1} parent=1 // pred_check
      _
    $region15: #{tpu_custom_call.1} parent=1 // pred_check_branch
      %38 = sbr.rel (0) target = $region17
    $region16: #{tpu_custom_call.1} parent=1 // pred_region
      %39 = dma.done [#allocation4], 128
    $region17: #{tpu_custom_call.1} parent=1 // pred_fallthru
      _
    // Predicated region
    $region18: #{tpu_custom_call.1} parent=1 // pred_check
      _
    $region19: #{tpu_custom_call.1} parent=1 // pred_check_branch
      %41 = sbr.rel (0) target = $region21
    $region20: #{tpu_custom_call.1} parent=1 // pred_region
      %42 = dma.done [#allocation7], 512
    $region21: #{tpu_custom_call.1} parent=1 // pred_fallthru
      _
    %p43 = scmp.eq.s32.totalorder 0, 0
    // Predicated region
    $region22: #{tpu_custom_call.1} parent=1 // pred_check
      %p44 = pneg %p43
    $region23: #{tpu_custom_call.1} parent=1 // pred_check_branch
      %46 = sbr.rel (%p44) target = $region25
    $region24: #{tpu_custom_call.1} parent=1 // pred_region
      %vm47 = vcmask 254976
      %48 = vst.msk [vmem:[#allocation2] sm:$0x3] %vm47, 0.0
    $region25: #{tpu_custom_call.1} parent=1 // pred_fallthru
      _
    %v49 = vld [vmem:[#allocation2] sm:$0x3]
    %v50 = vld [vmem:[#allocation3] sm:$0xf]
    %v51 = vld [vmem:[#allocation3 + $0x4] sm:$0xf]
    %v52 = vunpack.c.l.bf16 %v50
    %v53 = vunpack.c.l.bf16 %v51
    %vm54 = vcmask 261120
    %v55 = vsel %vm54, %v52, 0.0
    %v56 = vrot.slane %v55, 4
    %v57 = vadd.f32 %v55, %v56
    %v58 = vrot.slane %v57, 2
    %v59 = vadd.f32 %v57, %v58
    %v60 = vrot.slane %v59, 1
    %v61 = vadd.f32 %v59, %v60
    %v62 = vsel %vm54, %v53, 0.0
    %v63 = vrot.slane %v62, 4
    %v64 = vadd.f32 %v62, %v63
    %v65 = vrot.slane %v64, 2
    %v66 = vadd.f32 %v64, %v65
    %v67 = vrot.slane %v66, 1
    %v68 = vadd.f32 %v66, %v67
    %vm71 = vcmask 1041409
    %v72 = vsel %vm71, %v68, %v61
    %v74 = vadd.f32 %v49, %v72
    %vm75 = vcmask 254976
    %76 = vst.msk [vmem:[#allocation2] sm:$0x3] %vm75, %v74
    // Predicated region
    $region26: #{tpu_custom_call.1} parent=1 // pred_check
      %p77 = pneg %p43
    $region27: #{tpu_custom_call.1} parent=1 // pred_check_branch
      %79 = sbr.rel (%p77) target = $region29
    $region28: #{tpu_custom_call.1} parent=1 // pred_region
      %v80 = vld [vmem:[#allocation2] sm:$0x3]
      %v81 = vmul.f32 %v80, 0.125
      %v82 = vld [vmem:[#allocation6] sm:$0xff]
      %v83 = vld [vmem:[#allocation6 + $0x8] sm:$0xff]
      %v84 = vld [vmem:[#allocation6 + $0x10] sm:$0xff]
      %v85 = vld [vmem:[#allocation6 + $0x18] sm:$0xff]
      %v86 = vld [vmem:[%s2] sm:$0x1]
      %v88 = vlaneseq
      %v89 = vshrl.u32 %v88, 7
      %v90 = vsub.s32 0, %v89
      %v91 = vrot.slane %v86, %v90
      %v94 = vsel %vm54, %v81, 0
      %96 = vmatprep.subr.mxu0 0.0
      %97 = vmatpush1.msra.mxu0 %v82
      %98 = vmatprep.subr.mxu0 0.0
      %99 = vmatpush1.msra.mxu0 %v83
      %100 = vmatprep.subr.mxu0 0.0
      %101 = vmatpush1.msra.mxu0 %v84
      %102 = vmatprep.subr.mxu0 0.0
      %103 = vmatpush1.msra.mxu0 %v85
      %104 = vmatprep.subr.mxu0 0.0
      %105 = vmatpush1.msra.mxu0 0.0
      %106 = vmatprep.subr.mxu0 0.0
      %107 = vmatpush1.msra.mxu0 0.0
      %108 = vmatprep.subr.mxu0 0.0
      %109 = vmatpush1.msra.mxu0 0.0
      %110 = vmatprep.subr.mxu0 0.0
      %111 = vmatpush1.msra.mxu0 0.0
      %112 = vmatprep.subr.mxu0 0.0
      %113 = vmatpush1.msra.mxu0 0.0
      %114 = vmatprep.subr.mxu0 0.0
      %115 = vmatpush1.msra.mxu0 0.0
      %116 = vmatprep.subr.mxu0 0.0
      %117 = vmatpush1.msra.mxu0 0.0
      %118 = vmatprep.subr.mxu0 0.0
      %119 = vmatpush1.msra.mxu0 0.0
      %120 = vmatprep.subr.mxu0 0.0
      %121 = vmatpush1.msra.mxu0 0.0
      %122 = vmatprep.subr.mxu0 0.0
      %123 = vmatpush1.msra.mxu0 0.0
      %124 = vmatprep.subr.mxu0 0.0
      %125 = vmatpush1.msra.mxu0 0.0
      %126 = vmatprep.subr.mxu0 0.0
      %127 = vmatpush1.msra.mxu0 0.0
      %128 = vmatprep.subr.mxu0 0.0
      %129 = vmatpush1.msra.mxu0 0.0
      %130 = vmatprep.subr.mxu0 0.0
      %131 = vmatpush1.msra.mxu0 0.0
      %132 = vmatprep.subr.mxu0 0.0
      %133 = vmatpush1.msra.mxu0 0.0
      %134 = vmatprep.subr.mxu0 0.0
      %135 = vmatpush1.msra.mxu0 0.0
      %136 = vmatprep.subr.mxu0 0.0
      %137 = vmatpush1.msra.mxu0 0.0
      %138 = vmatprep.subr.mxu0 0.0
      %139 = vmatpush1.msra.mxu0 0.0
      %140 = vmatprep.subr.mxu0 0.0
      %141 = vmatpush1.msra.mxu0 0.0
      %142 = vmatprep.subr.mxu0 0.0
      %143 = vmatpush1.msra.mxu0 0.0
      %144 = vmatprep.subr.mxu0 0.0
      %145 = vmatpush1.msra.mxu0 0.0
      %146 = vmatprep.subr.mxu0 0.0
      %147 = vmatpush1.msra.mxu0 0.0
      %148 = vmatprep.subr.mxu0 0.0
      %149 = vmatpush1.msra.mxu0 0.0
      %150 = vmatprep.subr.mxu0 0.0
      %151 = vmatpush1.msra.mxu0 0.0
      %152 = vmatprep.subr.mxu0 0.0
      %153 = vmatpush1.msra.mxu0 0.0
      %154 = vmatprep.subr.mxu0 0.0
      %155 = vmatpush1.msra.mxu0 0.0
      %156 = vmatprep.subr.mxu0 0.0
      %157 = vmatpush1.msra.mxu0 0.0
      %158 = vmatprep.subr.mxu0 0.0
      %159 = vmatpush1.msra.mxu0 0.0
      %160 = vmatprep.mubr.f32.mxu0 0.0
      %161 = vmatmul.mubr.f32.gmra.mrb[0].mxu0 %v94
      %v162 = vpop.f32.mrb[0].mxu0
      %v163 = vadd.f32 %v91, %v162
      %v164 = vpop.f32.mrb[0].mxu0
      %165 = vdwg.mxu0
      %166 = vst [vmem:[#allocation8] sm:$0x3] %v163
    $region29: #{tpu_custom_call.1} parent=1 // pred_fallthru
      _
    // Predicated region
    $region30: #{tpu_custom_call.1} parent=1 // pred_check
      _
    $region31: #{tpu_custom_call.1} parent=1 // pred_check_branch
      %168 = sbr.rel (0) target = $region33
    $region32: #{tpu_custom_call.1} parent=1 // pred_region
      %s170 = ssub.s32 32, 32
      %171 = vsyncadd [#allocation5], %s170
      %s173 = sshll.u32 [#allocation8], 4
      %s174 = int_to_ptr.vmem [resolvable:$true] %s173
      %176 = dma.vmem_to_hbm [thread:$0]  %s174, 32, %s3, [#allocation5]
    $region33: #{tpu_custom_call.1} parent=1 // pred_fallthru
      _
    // Predicated region
    $region34: #{tpu_custom_call.1} parent=1 // pred_check
      _
    $region35: #{tpu_custom_call.1} parent=1 // pred_check_branch
      %178 = sbr.rel (0) target = $region37
    $region36: #{tpu_custom_call.1} parent=1 // pred_region
      %179 = dma.done [#allocation5], 32
    $region37: #{tpu_custom_call.1} parent=1 // pred_fallthru
      _
    %180 = vsyncpa [#allocation4], 1
    %181 = vsyncpa [#allocation7], 1
    %182 = vsyncpa [#allocation5], 1

</llo_original>
